<compile_context>
chip_gen: v7x
topology: tpu7x:2x2x1
jax: 0.10.0
libtpu: 0.0.40
codegen_flags: <defaults>
</compile_context>

<pallas_src>
import functools
import random

import jax
import jax.numpy as jnp
from jax.experimental import pallas as pl
from jax.experimental.pallas import tpu as pltpu


def _flip_kernel(*refs):
    """refs = n input refs followed by n output refs, all blocks of shape (TR, L).

    For every (input, output) pair writes out[:, j] = in[:, L-1-j]: reversal of the
    lane axis via a bit-complement butterfly (L must be a power of two).
    """
    n = len(refs) // 2
    in_refs, out_refs = refs[:n], refs[n:]
    shape = in_refs[0].shape
    axis = len(shape) - 1
    L = shape[axis]
    lane = jax.lax.broadcasted_iota(jnp.int32, shape, axis)

    # Reversal j -> L-1-j == j XOR (L-1): complement one index bit per step.
    # At each step the source for lane j is lane (j XOR step); we roll the data both
    # directions and pick the operand that actually came from (j XOR step), detected
    # by rolling an index vector the same way (roll-convention independent, exact).
    # Masks are computed once per grid step and shared by every tensor in the group.
    masks = []
    step = 1
    while step < L:
        masks.append((step, pltpu.roll(lane, step, axis) == (lane ^ step)))
        step *= 2

    for x_ref, o_ref in zip(in_refs, out_refs):
        x = x_ref[...]
        for step, take_fwd in masks:
            x = jnp.where(take_fwd,
                          pltpu.roll(x, step, axis),
                          pltpu.roll(x, L - step, axis))
        o_ref[...] = x


def _choose_row_block(num_rows, num_lanes, itemsize):
    """Largest row tile that divides num_rows, is a multiple of 8, and keeps one
    block around <= 1 MiB so double-buffered in+out blocks stay far below the
    scoped-VMEM limit on v5e/v6e/v7x."""
    if num_rows <= 8 or num_rows % 8:
        return num_rows  # block == full array dim is always a legal block shape
    max_rows = max(8, (1 << 20) // max(1, num_lanes * itemsize))
    tr = min(num_rows, (max_rows // 8) * 8)
    tr = max(tr, 8)
    while num_rows % tr:
        tr -= 8
    return tr


@functools.lru_cache(maxsize=None)
def _build_flip_call(n_tensors, num_rows, num_lanes, dtype, row_block):
    """One fused pallas_call reversing the lane axis of `n_tensors` same-shaped
    [num_rows, num_lanes] slabs."""
    spec = pl.BlockSpec((row_block, num_lanes), lambda r: (r, 0))
    flip = pl.pallas_call(
        _flip_kernel,
        out_shape=tuple(
            jax.ShapeDtypeStruct((num_rows, num_lanes), dtype)
            for _ in range(n_tensors)
        ),
        grid=(num_rows // row_block,),
        in_specs=[spec] * n_tensors,
        out_specs=tuple(spec for _ in range(n_tensors)),
        compiler_params=pltpu.CompilerParams(dimension_semantics=("parallel",)),
    )
    return jax.jit(flip)


def flip_batch_pallas(xs):
    """torch.flip(x, dims=[2, 3]) for every x in xs (all with identical shape
    [b, c, i, s] and dtype), fused into a single Pallas call."""
    b, c, i, s = xs[0].shape
    lanes = i * s
    if lanes & (lanes - 1):
        # TODO(synk): non-power-of-two i*s — move the coarse reversal into the
        # BlockSpec index_map and keep only an in-block permutation in the kernel.
        return [jnp.flip(x, axis=(2, 3)) for x in xs]
    rows = b * c
    itemsize = jnp.dtype(xs[0].dtype).itemsize
    row_block = _choose_row_block(rows, lanes, itemsize)
    call = _build_flip_call(len(xs), rows, lanes, xs[0].dtype, row_block)
    outs = call(*[x.reshape(rows, lanes) for x in xs])  # row-major reshape: free
    if not isinstance(outs, (tuple, list)):
        outs = (outs,)
    return [y.reshape(b, c, i, s) for y in outs]


class HorizontalFlipAugmenter:
    """JAX/Pallas port of the PyTorch HorizontalFlipAugmenter forward pass."""

    def __init__(self, prob, locations, modalities,
                 train_mode="supervised", learn_framework="none", seed=0):
        self.p = 1.0 if (train_mode == "predictive" and learn_framework == "MTSS") else prob
        self.locations = locations
        self.modalities = modalities
        # Host-side RNG, same role as Python's random() in the PyTorch module;
        # drawing all decisions on host avoids per-modality device->host syncs.
        self._rng = random.Random(seed)

    def forward(self, org_loc_inputs, labels=None):
        keys = [(loc, mod) for loc in self.locations for mod in self.modalities]
        flags = [1 if self._rng.random() < self.p else 0 for _ in keys]

        # Group same-shape/dtype tensors that need flipping -> one fused pallas_call
        # per group; non-flipped tensors are returned as-is (no kernel, no HBM copy).
        groups = {}
        for idx, (loc, mod) in enumerate(keys):
            if flags[idx]:
                x = org_loc_inputs[loc][mod]
                groups.setdefault((x.shape, x.dtype), []).append(idx)
        flipped = {}
        for idxs in groups.values():
            xs = [org_loc_inputs[keys[i][0]][keys[i][1]] for i in idxs]
            flipped.update(zip(idxs, flip_batch_pallas(xs)))

        aug_loc_inputs = {}
        batch = None
        for idx, (loc, mod) in enumerate(keys):
            x = org_loc_inputs[loc][mod]
            if batch is None:
                batch = x.shape[0]
            aug_loc_inputs.setdefault(loc, {})[mod] = flipped.get(idx, x)

        aug_mod_labels = jnp.tile(
            jnp.asarray(flags, dtype=jnp.float32)[None, :], (batch, 1))
        return aug_loc_inputs, aug_mod_labels, labels


if __name__ == "__main__":
    locations = ["pos1", "pos2"]
    modalities = ["audio", "seismic"]
    B, C, I, S = 2, 4, 16, 16

    key = jax.random.PRNGKey(0)
    org_loc_inputs = {}
    for loc in locations:
        org_loc_inputs[loc] = {}
        for mod in modalities:
            key, sub = jax.random.split(key)
            org_loc_inputs[loc][mod] = jax.random.normal(sub, (B, C, I, S), jnp.float32)

    labels = jnp.arange(B, dtype=jnp.int32)

    # 1) Direct kernel check: flip all four tensors in ONE fused pallas_call.
    xs = [org_loc_inputs[l][m] for l in locations for m in modalities]
    ys = flip_batch_pallas(xs)
    jax.block_until_ready(ys)
    for x, y in zip(xs, ys):
        assert jnp.array_equal(y, jnp.flip(x, axis=(2, 3))), "flip kernel mismatch"

    # 2) Module-level check on the p == 1 branch (predictive + MTSS): every tensor
    #    is flipped, so the fused kernel path is exercised deterministically.
    aug = HorizontalFlipAugmenter(prob=0.5, locations=locations, modalities=modalities,
                                  train_mode="predictive", learn_framework="MTSS", seed=0)
    aug_inputs, aug_mod_labels, out_labels = aug.forward(org_loc_inputs, labels)
    jax.block_until_ready((aug_inputs, aug_mod_labels))
    idx = 0
    for loc in locations:
        for mod in modalities:
            x = org_loc_inputs[loc][mod]
            flipped = bool(aug_mod_labels[0, idx] > 0)
            ref = jnp.flip(x, axis=(2, 3)) if flipped else x
            assert jnp.array_equal(aug_inputs[loc][mod], ref), "augmenter mismatch (p=1)"
            idx += 1
    assert aug_mod_labels.shape == (B, len(locations) * len(modalities))
    assert bool(jnp.all(aug_mod_labels == 1.0))
    assert out_labels is labels

    # 3) Module-level check with prob < 1: non-flipped tensors alias the input
    #    (zero HBM traffic), flipped ones match jnp.flip exactly.
    aug2 = HorizontalFlipAugmenter(prob=0.5, locations=locations, modalities=modalities,
                                   seed=123)
    aug_inputs2, aug_mod_labels2, _ = aug2.forward(org_loc_inputs, labels)
    jax.block_until_ready((aug_inputs2, aug_mod_labels2))
    idx = 0
    for loc in locations:
        for mod in modalities:
            x = org_loc_inputs[loc][mod]
            flipped = bool(aug_mod_labels2[0, idx] > 0)
            ref = jnp.flip(x, axis=(2, 3)) if flipped else x
            assert jnp.array_equal(aug_inputs2[loc][mod], ref), "augmenter mismatch (p<1)"
            if not flipped:
                assert aug_inputs2[loc][mod] is x  # passthrough skips the kernel
            idx += 1

    print("KERNEL_OK")
</pallas_src>

<mosaic_0001>
module attributes {stable_mosaic.version = 11 : i64} {
  func.func @_flip_kernel(%arg0: i32, %arg1: memref<8x256xf32, #tpu.memory_space<vmem>>, %arg2: memref<8x256xf32, #tpu.memory_space<vmem>>, %arg3: memref<8x256xf32, #tpu.memory_space<vmem>>, %arg4: memref<8x256xf32, #tpu.memory_space<vmem>>, %arg5: memref<8x256xf32, #tpu.memory_space<vmem>>, %arg6: memref<8x256xf32, #tpu.memory_space<vmem>>, %arg7: memref<8x256xf32, #tpu.memory_space<vmem>>, %arg8: memref<8x256xf32, #tpu.memory_space<vmem>>) attributes {dimension_semantics = [#tpu.dimension_semantics<parallel>], iteration_bounds = array<i64: 1>, scalar_prefetch = 0 : i64, scratch_operands = 0 : i64, tpu.core_type = #tpu.core_type<tc>, window_params = [{transform_indices = @transform_0, window_bounds = array<i64: 8, 256>}, {transform_indices = @transform_1, window_bounds = array<i64: 8, 256>}, {transform_indices = @transform_2, window_bounds = array<i64: 8, 256>}, {transform_indices = @transform_3, window_bounds = array<i64: 8, 256>}, {transform_indices = @transform_4, window_bounds = array<i64: 8, 256>}, {transform_indices = @transform_5, window_bounds = array<i64: 8, 256>}, {transform_indices = @transform_6, window_bounds = array<i64: 8, 256>}, {transform_indices = @transform_7, window_bounds = array<i64: 8, 256>}]} {
    %0 = tpu.iota {dimensions = array<i32: 1>} : vector<8x256xi32>
    %c1_i32 = arith.constant 1 : i32
    %1 = tpu.dynamic_rotate %0 by %c1_i32 dim 1 : vector<8x256xi32>, i32 -> vector<8x256xi32>
    %c1_i32_0 = arith.constant 1 : i32
    %2 = vector.broadcast %c1_i32_0 : i32 to vector<8x256xi32>
    %3 = arith.xori %0, %2 : vector<8x256xi32>
    %4 = arith.cmpi eq, %1, %3 : vector<8x256xi32>
    %c2_i32 = arith.constant 2 : i32
    %5 = tpu.dynamic_rotate %0 by %c2_i32 dim 1 : vector<8x256xi32>, i32 -> vector<8x256xi32>
    %c2_i32_1 = arith.constant 2 : i32
    %6 = vector.broadcast %c2_i32_1 : i32 to vector<8x256xi32>
    %7 = arith.xori %0, %6 : vector<8x256xi32>
    %8 = arith.cmpi eq, %5, %7 : vector<8x256xi32>
    %c4_i32 = arith.constant 4 : i32
    %9 = tpu.dynamic_rotate %0 by %c4_i32 dim 1 : vector<8x256xi32>, i32 -> vector<8x256xi32>
    %c4_i32_2 = arith.constant 4 : i32
    %10 = vector.broadcast %c4_i32_2 : i32 to vector<8x256xi32>
    %11 = arith.xori %0, %10 : vector<8x256xi32>
    %12 = arith.cmpi eq, %9, %11 : vector<8x256xi32>
    %c8_i32 = arith.constant 8 : i32
    %13 = tpu.dynamic_rotate %0 by %c8_i32 dim 1 : vector<8x256xi32>, i32 -> vector<8x256xi32>
    %c8_i32_3 = arith.constant 8 : i32
    %14 = vector.broadcast %c8_i32_3 : i32 to vector<8x256xi32>
    %15 = arith.xori %0, %14 : vector<8x256xi32>
    %16 = arith.cmpi eq, %13, %15 : vector<8x256xi32>
    %c16_i32 = arith.constant 16 : i32
    %17 = tpu.dynamic_rotate %0 by %c16_i32 dim 1 : vector<8x256xi32>, i32 -> vector<8x256xi32>
    %c16_i32_4 = arith.constant 16 : i32
    %18 = vector.broadcast %c16_i32_4 : i32 to vector<8x256xi32>
    %19 = arith.xori %0, %18 : vector<8x256xi32>
    %20 = arith.cmpi eq, %17, %19 : vector<8x256xi32>
    %c32_i32 = arith.constant 32 : i32
    %21 = tpu.dynamic_rotate %0 by %c32_i32 dim 1 : vector<8x256xi32>, i32 -> vector<8x256xi32>
    %c32_i32_5 = arith.constant 32 : i32
    %22 = vector.broadcast %c32_i32_5 : i32 to vector<8x256xi32>
    %23 = arith.xori %0, %22 : vector<8x256xi32>
    %24 = arith.cmpi eq, %21, %23 : vector<8x256xi32>
    %c64_i32 = arith.constant 64 : i32
    %25 = tpu.dynamic_rotate %0 by %c64_i32 dim 1 : vector<8x256xi32>, i32 -> vector<8x256xi32>
    %c64_i32_6 = arith.constant 64 : i32
    %26 = vector.broadcast %c64_i32_6 : i32 to vector<8x256xi32>
    %27 = arith.xori %0, %26 : vector<8x256xi32>
    %28 = arith.cmpi eq, %25, %27 : vector<8x256xi32>
    %c128_i32 = arith.constant 128 : i32
    %29 = tpu.dynamic_rotate %0 by %c128_i32 dim 1 : vector<8x256xi32>, i32 -> vector<8x256xi32>
    %c128_i32_7 = arith.constant 128 : i32
    %30 = vector.broadcast %c128_i32_7 : i32 to vector<8x256xi32>
    %31 = arith.xori %0, %30 : vector<8x256xi32>
    %32 = arith.cmpi eq, %29, %31 : vector<8x256xi32>
    %c0 = arith.constant 0 : index
    %c0_8 = arith.constant 0 : index
    %33 = vector.load %arg1[%c0, %c0_8] : memref<8x256xf32, #tpu.memory_space<vmem>>, vector<8x256xf32>
    %c1_i32_9 = arith.constant 1 : i32
    %34 = tpu.dynamic_rotate %33 by %c1_i32_9 dim 1 : vector<8x256xf32>, i32 -> vector<8x256xf32>
    %c255_i32 = arith.constant 255 : i32
    %35 = tpu.dynamic_rotate %33 by %c255_i32 dim 1 : vector<8x256xf32>, i32 -> vector<8x256xf32>
    %36 = arith.select %4, %34, %35 : vector<8x256xi1>, vector<8x256xf32>
    %c2_i32_10 = arith.constant 2 : i32
    %37 = tpu.dynamic_rotate %36 by %c2_i32_10 dim 1 : vector<8x256xf32>, i32 -> vector<8x256xf32>
    %c254_i32 = arith.constant 254 : i32
    %38 = tpu.dynamic_rotate %36 by %c254_i32 dim 1 : vector<8x256xf32>, i32 -> vector<8x256xf32>
    %39 = arith.select %8, %37, %38 : vector<8x256xi1>, vector<8x256xf32>
    %c4_i32_11 = arith.constant 4 : i32
    %40 = tpu.dynamic_rotate %39 by %c4_i32_11 dim 1 : vector<8x256xf32>, i32 -> vector<8x256xf32>
    %c252_i32 = arith.constant 252 : i32
    %41 = tpu.dynamic_rotate %39 by %c252_i32 dim 1 : vector<8x256xf32>, i32 -> vector<8x256xf32>
    %42 = arith.select %12, %40, %41 : vector<8x256xi1>, vector<8x256xf32>
    %c8_i32_12 = arith.constant 8 : i32
    %43 = tpu.dynamic_rotate %42 by %c8_i32_12 dim 1 : vector<8x256xf32>, i32 -> vector<8x256xf32>
    %c248_i32 = arith.constant 248 : i32
    %44 = tpu.dynamic_rotate %42 by %c248_i32 dim 1 : vector<8x256xf32>, i32 -> vector<8x256xf32>
    %45 = arith.select %16, %43, %44 : vector<8x256xi1>, vector<8x256xf32>
    %c16_i32_13 = arith.constant 16 : i32
    %46 = tpu.dynamic_rotate %45 by %c16_i32_13 dim 1 : vector<8x256xf32>, i32 -> vector<8x256xf32>
    %c240_i32 = arith.constant 240 : i32
    %47 = tpu.dynamic_rotate %45 by %c240_i32 dim 1 : vector<8x256xf32>, i32 -> vector<8x256xf32>
    %48 = arith.select %20, %46, %47 : vector<8x256xi1>, vector<8x256xf32>
    %c32_i32_14 = arith.constant 32 : i32
    %49 = tpu.dynamic_rotate %48 by %c32_i32_14 dim 1 : vector<8x256xf32>, i32 -> vector<8x256xf32>
    %c224_i32 = arith.constant 224 : i32
    %50 = tpu.dynamic_rotate %48 by %c224_i32 dim 1 : vector<8x256xf32>, i32 -> vector<8x256xf32>
    %51 = arith.select %24, %49, %50 : vector<8x256xi1>, vector<8x256xf32>
    %c64_i32_15 = arith.constant 64 : i32
    %52 = tpu.dynamic_rotate %51 by %c64_i32_15 dim 1 : vector<8x256xf32>, i32 -> vector<8x256xf32>
    %c192_i32 = arith.constant 192 : i32
    %53 = tpu.dynamic_rotate %51 by %c192_i32 dim 1 : vector<8x256xf32>, i32 -> vector<8x256xf32>
    %54 = arith.select %28, %52, %53 : vector<8x256xi1>, vector<8x256xf32>
    %c128_i32_16 = arith.constant 128 : i32
    %55 = tpu.dynamic_rotate %54 by %c128_i32_16 dim 1 : vector<8x256xf32>, i32 -> vector<8x256xf32>
    %c128_i32_17 = arith.constant 128 : i32
    %56 = tpu.dynamic_rotate %54 by %c128_i32_17 dim 1 : vector<8x256xf32>, i32 -> vector<8x256xf32>
    %57 = arith.select %32, %55, %56 : vector<8x256xi1>, vector<8x256xf32>
    %c0_18 = arith.constant 0 : index
    %c0_19 = arith.constant 0 : index
    %58 = vector.load %arg5[%c0_18, %c0_19] : memref<8x256xf32, #tpu.memory_space<vmem>>, vector<8x256xf32>
    tpu.vector_store %arg5[%c0_18, %c0_19], %57 {strides = array<i32>} : memref<8x256xf32, #tpu.memory_space<vmem>>, vector<8x256xf32>,
    %c0_20 = arith.constant 0 : index
    %c0_21 = arith.constant 0 : index
    %59 = vector.load %arg2[%c0_20, %c0_21] : memref<8x256xf32, #tpu.memory_space<vmem>>, vector<8x256xf32>
    %c1_i32_22 = arith.constant 1 : i32
    %60 = tpu.dynamic_rotate %59 by %c1_i32_22 dim 1 : vector<8x256xf32>, i32 -> vector<8x256xf32>
    %c255_i32_23 = arith.constant 255 : i32
    %61 = tpu.dynamic_rotate %59 by %c255_i32_23 dim 1 : vector<8x256xf32>, i32 -> vector<8x256xf32>
    %62 = arith.select %4, %60, %61 : vector<8x256xi1>, vector<8x256xf32>
    %c2_i32_24 = arith.constant 2 : i32
    %63 = tpu.dynamic_rotate %62 by %c2_i32_24 dim 1 : vector<8x256xf32>, i32 -> vector<8x256xf32>
    %c254_i32_25 = arith.constant 254 : i32
    %64 = tpu.dynamic_rotate %62 by %c254_i32_25 dim 1 : vector<8x256xf32>, i32 -> vector<8x256xf32>
    %65 = arith.select %8, %63, %64 : vector<8x256xi1>, vector<8x256xf32>
    %c4_i32_26 = arith.constant 4 : i32
    %66 = tpu.dynamic_rotate %65 by %c4_i32_26 dim 1 : vector<8x256xf32>, i32 -> vector<8x256xf32>
    %c252_i32_27 = arith.constant 252 : i32
    %67 = tpu.dynamic_rotate %65 by %c252_i32_27 dim 1 : vector<8x256xf32>, i32 -> vector<8x256xf32>
    %68 = arith.select %12, %66, %67 : vector<8x256xi1>, vector<8x256xf32>
    %c8_i32_28 = arith.constant 8 : i32
    %69 = tpu.dynamic_rotate %68 by %c8_i32_28 dim 1 : vector<8x256xf32>, i32 -> vector<8x256xf32>
    %c248_i32_29 = arith.constant 248 : i32
    %70 = tpu.dynamic_rotate %68 by %c248_i32_29 dim 1 : vector<8x256xf32>, i32 -> vector<8x256xf32>
    %71 = arith.select %16, %69, %70 : vector<8x256xi1>, vector<8x256xf32>
    %c16_i32_30 = arith.constant 16 : i32
    %72 = tpu.dynamic_rotate %71 by %c16_i32_30 dim 1 : vector<8x256xf32>, i32 -> vector<8x256xf32>
    %c240_i32_31 = arith.constant 240 : i32
    %73 = tpu.dynamic_rotate %71 by %c240_i32_31 dim 1 : vector<8x256xf32>, i32 -> vector<8x256xf32>
    %74 = arith.select %20, %72, %73 : vector<8x256xi1>, vector<8x256xf32>
    %c32_i32_32 = arith.constant 32 : i32
    %75 = tpu.dynamic_rotate %74 by %c32_i32_32 dim 1 : vector<8x256xf32>, i32 -> vector<8x256xf32>
    %c224_i32_33 = arith.constant 224 : i32
    %76 = tpu.dynamic_rotate %74 by %c224_i32_33 dim 1 : vector<8x256xf32>, i32 -> vector<8x256xf32>
    %77 = arith.select %24, %75, %76 : vector<8x256xi1>, vector<8x256xf32>
    %c64_i32_34 = arith.constant 64 : i32
    %78 = tpu.dynamic_rotate %77 by %c64_i32_34 dim 1 : vector<8x256xf32>, i32 -> vector<8x256xf32>
    %c192_i32_35 = arith.constant 192 : i32
    %79 = tpu.dynamic_rotate %77 by %c192_i32_35 dim 1 : vector<8x256xf32>, i32 -> vector<8x256xf32>
    %80 = arith.select %28, %78, %79 : vector<8x256xi1>, vector<8x256xf32>
    %c128_i32_36 = arith.constant 128 : i32
    %81 = tpu.dynamic_rotate %80 by %c128_i32_36 dim 1 : vector<8x256xf32>, i32 -> vector<8x256xf32>
    %c128_i32_37 = arith.constant 128 : i32
    %82 = tpu.dynamic_rotate %80 by %c128_i32_37 dim 1 : vector<8x256xf32>, i32 -> vector<8x256xf32>
    %83 = arith.select %32, %81, %82 : vector<8x256xi1>, vector<8x256xf32>
    %c0_38 = arith.constant 0 : index
    %c0_39 = arith.constant 0 : index
    %84 = vector.load %arg6[%c0_38, %c0_39] : memref<8x256xf32, #tpu.memory_space<vmem>>, vector<8x256xf32>
    tpu.vector_store %arg6[%c0_38, %c0_39], %83 {strides = array<i32>} : memref<8x256xf32, #tpu.memory_space<vmem>>, vector<8x256xf32>,
    %c0_40 = arith.constant 0 : index
    %c0_41 = arith.constant 0 : index
    %85 = vector.load %arg3[%c0_40, %c0_41] : memref<8x256xf32, #tpu.memory_space<vmem>>, vector<8x256xf32>
    %c1_i32_42 = arith.constant 1 : i32
    %86 = tpu.dynamic_rotate %85 by %c1_i32_42 dim 1 : vector<8x256xf32>, i32 -> vector<8x256xf32>
    %c255_i32_43 = arith.constant 255 : i32
    %87 = tpu.dynamic_rotate %85 by %c255_i32_43 dim 1 : vector<8x256xf32>, i32 -> vector<8x256xf32>
    %88 = arith.select %4, %86, %87 : vector<8x256xi1>, vector<8x256xf32>
    %c2_i32_44 = arith.constant 2 : i32
    %89 = tpu.dynamic_rotate %88 by %c2_i32_44 dim 1 : vector<8x256xf32>, i32 -> vector<8x256xf32>
    %c254_i32_45 = arith.constant 254 : i32
    %90 = tpu.dynamic_rotate %88 by %c254_i32_45 dim 1 : vector<8x256xf32>, i32 -> vector<8x256xf32>
    %91 = arith.select %8, %89, %90 : vector<8x256xi1>, vector<8x256xf32>
    %c4_i32_46 = arith.constant 4 : i32
    %92 = tpu.dynamic_rotate %91 by %c4_i32_46 dim 1 : vector<8x256xf32>, i32 -> vector<8x256xf32>
    %c252_i32_47 = arith.constant 252 : i32
    %93 = tpu.dynamic_rotate %91 by %c252_i32_47 dim 1 : vector<8x256xf32>, i32 -> vector<8x256xf32>
    %94 = arith.select %12, %92, %93 : vector<8x256xi1>, vector<8x256xf32>
    %c8_i32_48 = arith.constant 8 : i32
    %95 = tpu.dynamic_rotate %94 by %c8_i32_48 dim 1 : vector<8x256xf32>, i32 -> vector<8x256xf32>
    %c248_i32_49 = arith.constant 248 : i32
    %96 = tpu.dynamic_rotate %94 by %c248_i32_49 dim 1 : vector<8x256xf32>, i32 -> vector<8x256xf32>
    %97 = arith.select %16, %95, %96 : vector<8x256xi1>, vector<8x256xf32>
    %c16_i32_50 = arith.constant 16 : i32
    %98 = tpu.dynamic_rotate %97 by %c16_i32_50 dim 1 : vector<8x256xf32>, i32 -> vector<8x256xf32>
    %c240_i32_51 = arith.constant 240 : i32
    %99 = tpu.dynamic_rotate %97 by %c240_i32_51 dim 1 : vector<8x256xf32>, i32 -> vector<8x256xf32>
    %100 = arith.select %20, %98, %99 : vector<8x256xi1>, vector<8x256xf32>
    %c32_i32_52 = arith.constant 32 : i32
    %101 = tpu.dynamic_rotate %100 by %c32_i32_52 dim 1 : vector<8x256xf32>, i32 -> vector<8x256xf32>
    %c224_i32_53 = arith.constant 224 : i32
    %102 = tpu.dynamic_rotate %100 by %c224_i32_53 dim 1 : vector<8x256xf32>, i32 -> vector<8x256xf32>
    %103 = arith.select %24, %101, %102 : vector<8x256xi1>, vector<8x256xf32>
    %c64_i32_54 = arith.constant 64 : i32
    %104 = tpu.dynamic_rotate %103 by %c64_i32_54 dim 1 : vector<8x256xf32>, i32 -> vector<8x256xf32>
    %c192_i32_55 = arith.constant 192 : i32
    %105 = tpu.dynamic_rotate %103 by %c192_i32_55 dim 1 : vector<8x256xf32>, i32 -> vector<8x256xf32>
    %106 = arith.select %28, %104, %105 : vector<8x256xi1>, vector<8x256xf32>
    %c128_i32_56 = arith.constant 128 : i32
    %107 = tpu.dynamic_rotate %106 by %c128_i32_56 dim 1 : vector<8x256xf32>, i32 -> vector<8x256xf32>
    %c128_i32_57 = arith.constant 128 : i32
    %108 = tpu.dynamic_rotate %106 by %c128_i32_57 dim 1 : vector<8x256xf32>, i32 -> vector<8x256xf32>
    %109 = arith.select %32, %107, %108 : vector<8x256xi1>, vector<8x256xf32>
    %c0_58 = arith.constant 0 : index
    %c0_59 = arith.constant 0 : index
    %110 = vector.load %arg7[%c0_58, %c0_59] : memref<8x256xf32, #tpu.memory_space<vmem>>, vector<8x256xf32>
    tpu.vector_store %arg7[%c0_58, %c0_59], %109 {strides = array<i32>} : memref<8x256xf32, #tpu.memory_space<vmem>>, vector<8x256xf32>,
    %c0_60 = arith.constant 0 : index
    %c0_61 = arith.constant 0 : index
    %111 = vector.load %arg4[%c0_60, %c0_61] : memref<8x256xf32, #tpu.memory_space<vmem>>, vector<8x256xf32>
    %c1_i32_62 = arith.constant 1 : i32
    %112 = tpu.dynamic_rotate %111 by %c1_i32_62 dim 1 : vector<8x256xf32>, i32 -> vector<8x256xf32>
    %c255_i32_63 = arith.constant 255 : i32
    %113 = tpu.dynamic_rotate %111 by %c255_i32_63 dim 1 : vector<8x256xf32>, i32 -> vector<8x256xf32>
    %114 = arith.select %4, %112, %113 : vector<8x256xi1>, vector<8x256xf32>
    %c2_i32_64 = arith.constant 2 : i32
    %115 = tpu.dynamic_rotate %114 by %c2_i32_64 dim 1 : vector<8x256xf32>, i32 -> vector<8x256xf32>
    %c254_i32_65 = arith.constant 254 : i32
    %116 = tpu.dynamic_rotate %114 by %c254_i32_65 dim 1 : vector<8x256xf32>, i32 -> vector<8x256xf32>
    %117 = arith.select %8, %115, %116 : vector<8x256xi1>, vector<8x256xf32>
    %c4_i32_66 = arith.constant 4 : i32
    %118 = tpu.dynamic_rotate %117 by %c4_i32_66 dim 1 : vector<8x256xf32>, i32 -> vector<8x256xf32>
    %c252_i32_67 = arith.constant 252 : i32
    %119 = tpu.dynamic_rotate %117 by %c252_i32_67 dim 1 : vector<8x256xf32>, i32 -> vector<8x256xf32>
    %120 = arith.select %12, %118, %119 : vector<8x256xi1>, vector<8x256xf32>
    %c8_i32_68 = arith.constant 8 : i32
    %121 = tpu.dynamic_rotate %120 by %c8_i32_68 dim 1 : vector<8x256xf32>, i32 -> vector<8x256xf32>
    %c248_i32_69 = arith.constant 248 : i32
    %122 = tpu.dynamic_rotate %120 by %c248_i32_69 dim 1 : vector<8x256xf32>, i32 -> vector<8x256xf32>
    %123 = arith.select %16, %121, %122 : vector<8x256xi1>, vector<8x256xf32>
    %c16_i32_70 = arith.constant 16 : i32
    %124 = tpu.dynamic_rotate %123 by %c16_i32_70 dim 1 : vector<8x256xf32>, i32 -> vector<8x256xf32>
    %c240_i32_71 = arith.constant 240 : i32
    %125 = tpu.dynamic_rotate %123 by %c240_i32_71 dim 1 : vector<8x256xf32>, i32 -> vector<8x256xf32>
    %126 = arith.select %20, %124, %125 : vector<8x256xi1>, vector<8x256xf32>
    %c32_i32_72 = arith.constant 32 : i32
    %127 = tpu.dynamic_rotate %126 by %c32_i32_72 dim 1 : vector<8x256xf32>, i32 -> vector<8x256xf32>
    %c224_i32_73 = arith.constant 224 : i32
    %128 = tpu.dynamic_rotate %126 by %c224_i32_73 dim 1 : vector<8x256xf32>, i32 -> vector<8x256xf32>
    %129 = arith.select %24, %127, %128 : vector<8x256xi1>, vector<8x256xf32>
    %c64_i32_74 = arith.constant 64 : i32
    %130 = tpu.dynamic_rotate %129 by %c64_i32_74 dim 1 : vector<8x256xf32>, i32 -> vector<8x256xf32>
    %c192_i32_75 = arith.constant 192 : i32
    %131 = tpu.dynamic_rotate %129 by %c192_i32_75 dim 1 : vector<8x256xf32>, i32 -> vector<8x256xf32>
    %132 = arith.select %28, %130, %131 : vector<8x256xi1>, vector<8x256xf32>
    %c128_i32_76 = arith.constant 128 : i32
    %133 = tpu.dynamic_rotate %132 by %c128_i32_76 dim 1 : vector<8x256xf32>, i32 -> vector<8x256xf32>
    %c128_i32_77 = arith.constant 128 : i32
    %134 = tpu.dynamic_rotate %132 by %c128_i32_77 dim 1 : vector<8x256xf32>, i32 -> vector<8x256xf32>
    %135 = arith.select %32, %133, %134 : vector<8x256xi1>, vector<8x256xf32>
    %c0_78 = arith.constant 0 : index
    %c0_79 = arith.constant 0 : index
    %136 = vector.load %arg8[%c0_78, %c0_79] : memref<8x256xf32, #tpu.memory_space<vmem>>, vector<8x256xf32>
    tpu.vector_store %arg8[%c0_78, %c0_79], %135 {strides = array<i32>} : memref<8x256xf32, #tpu.memory_space<vmem>>, vector<8x256xf32>,
    return
  }
  func.func @transform_0(%arg0: i32) -> (i32, i32) {
    %c0_i32 = arith.constant 0 : i32
    %c0_i32_0 = arith.constant 0 : i32
    return %arg0, %c0_i32 : i32, i32
  }
  func.func @transform_1(%arg0: i32) -> (i32, i32) {
    %c0_i32 = arith.constant 0 : i32
    %c0_i32_0 = arith.constant 0 : i32
    return %arg0, %c0_i32 : i32, i32
  }
  func.func @transform_2(%arg0: i32) -> (i32, i32) {
    %c0_i32 = arith.constant 0 : i32
    %c0_i32_0 = arith.constant 0 : i32
    return %arg0, %c0_i32 : i32, i32
  }
  func.func @transform_3(%arg0: i32) -> (i32, i32) {
    %c0_i32 = arith.constant 0 : i32
    %c0_i32_0 = arith.constant 0 : i32
    return %arg0, %c0_i32 : i32, i32
  }
  func.func @transform_4(%arg0: i32) -> (i32, i32) {
    %c0_i32 = arith.constant 0 : i32
    %c0_i32_0 = arith.constant 0 : i32
    return %arg0, %c0_i32 : i32, i32
  }
  func.func @transform_5(%arg0: i32) -> (i32, i32) {
    %c0_i32 = arith.constant 0 : i32
    %c0_i32_0 = arith.constant 0 : i32
    return %arg0, %c0_i32 : i32, i32
  }
  func.func @transform_6(%arg0: i32) -> (i32, i32) {
    %c0_i32 = arith.constant 0 : i32
    %c0_i32_0 = arith.constant 0 : i32
    return %arg0, %c0_i32 : i32, i32
  }
  func.func @transform_7(%arg0: i32) -> (i32, i32) {
    %c0_i32 = arith.constant 0 : i32
    %c0_i32_0 = arith.constant 0 : i32
    return %arg0, %c0_i32 : i32, i32
  }
}

</mosaic_0001>

<llo_original>
// kernel: tpu_custom_call.1
$region0: #{tpu_custom_call.1}
  #allocation0 [shape = 'u32[]', space=smem, size = 0x4, offset = 0x4, fixed_abs, tag = 'smem constant byte address 0x4 - core index']
  #allocation1 [shape = 'u32[144,128]{1,0:T(1,128)}', space=vmem, size = 0x12000, scoped, tag = 'internal scratch']
  %s0 = inlined_call_operand.hbm [shape: f32[8,256], index: 0, kind: input, shape index: {}]
  %s1 = inlined_call_operand.hbm [shape: f32[8,256], index: 1, kind: input, shape index: {}]
  %s2 = inlined_call_operand.hbm [shape: f32[8,256], index: 2, kind: input, shape index: {}]
  %s3 = inlined_call_operand.hbm [shape: f32[8,256], index: 3, kind: input, shape index: {}]
  %s4 = inlined_call_operand.hbm [shape: f32[8,256], index: 4, kind: output, shape index: {0}]
  %s5 = inlined_call_operand.hbm [shape: f32[8,256], index: 5, kind: output, shape index: {1}]
  %s6 = inlined_call_operand.hbm [shape: f32[8,256], index: 6, kind: output, shape index: {2}]
  %s7 = inlined_call_operand.hbm [shape: f32[8,256], index: 7, kind: output, shape index: {3}]
  %8 = xla_tuple %s4, %s5, %s6, %s7
  %s9 = sld [smem:[#allocation0]]
  $region66: #{tpu_custom_call.1} parent=0
    _
  %s11 = ssub.s32 1, %s9
  %s12 = scalar_select 0, %s11, %s9
  $region1: #{tpu_custom_call.1} parent=0
    #allocation2 [shape = 'u8[8192]{0}', space=vmem, size = 0x2000, scoped, tag = 'input window, operand 0, single buffered']
    #allocation3 [shape = 's32[1]{0}', space=sflag, size = 0x4, scoped, tag = 'scoped memory for tpu_custom_call.1']
    #allocation4 [shape = 's32[1]{0}', space=sflag, size = 0x4, scoped, tag = 'scoped memory for tpu_custom_call.1']
    #allocation5 [shape = 'u8[8192]{0}', space=vmem, size = 0x2000, scoped, tag = 'input window, operand 1, single buffered']
    #allocation6 [shape = 's32[1]{0}', space=sflag, size = 0x4, scoped, tag = 'scoped memory for tpu_custom_call.1']
    #allocation7 [shape = 'u8[8192]{0}', space=vmem, size = 0x2000, scoped, tag = 'input window, operand 2, single buffered']
    #allocation8 [shape = 'u8[8192]{0}', space=vmem, size = 0x2000, scoped, tag = 'input window, operand 3, single buffered']
    #allocation9 [shape = 's32[1]{0}', space=sflag, size = 0x4, scoped, tag = 'scoped memory for tpu_custom_call.1']
    #allocation10 [shape = 'u8[8192]{0}', space=vmem, size = 0x2000, scoped, tag = 'output window, operand 0, single buffered']
    #allocation11 [shape = 'u8[8192]{0}', space=vmem, size = 0x2000, scoped, tag = 'output window, operand 1, single buffered']
    #allocation12 [shape = 's32[1]{0}', space=sflag, size = 0x4, scoped, tag = 'scoped memory for tpu_custom_call.1']
    #allocation13 [shape = 'u8[8192]{0}', space=vmem, size = 0x2000, scoped, tag = 'output window, operand 2, single buffered']
    #allocation14 [shape = 'u8[8192]{0}', space=vmem, size = 0x2000, scoped, tag = 'output window, operand 3, single buffered']
    #allocation15 [shape = 's32[1]{0}', space=sflag, size = 0x4, scoped, tag = 'scoped memory for tpu_custom_call.1']
    %13 = vsyncpa [#allocation3], 0
    %14 = vsyncpa [#allocation6], 0
    %15 = vsyncpa [#allocation9], 0
    %16 = vsyncpa [#allocation4], 0
    %17 = vsyncpa [#allocation12], 0
    %18 = vsyncpa [#allocation15], 0
    // Predicated region
    $region2: #{tpu_custom_call.1} parent=1 // pred_check
      _
    $region3: #{tpu_custom_call.1} parent=1 // pred_check_branch
      %20 = sbr.rel (0) target = $region5
    $region4: #{tpu_custom_call.1} parent=1 // pred_region
      %s22 = ssub.s32 256, 256
      %23 = vsyncadd [#allocation3], %s22
      %s25 = sshll.u32 [#allocation2], 4
      %s26 = int_to_ptr.vmem [resolvable:$true] %s25
      %28 = dma.hbm_to_vmem [thread:$0]  %s0, 256, %s26, [#allocation3]
    $region5: #{tpu_custom_call.1} parent=1 // pred_fallthru
      _
    // Predicated region
    $region6: #{tpu_custom_call.1} parent=1 // pred_check
      _
    $region7: #{tpu_custom_call.1} parent=1 // pred_check_branch
      %30 = sbr.rel (0) target = $region9
    $region8: #{tpu_custom_call.1} parent=1 // pred_region
      %s32 = ssub.s32 256, 256
      %33 = vsyncadd [#allocation6], %s32
      %s35 = sshll.u32 [#allocation5], 4
      %s36 = int_to_ptr.vmem [resolvable:$true] %s35
      %38 = dma.hbm_to_vmem [thread:$0]  %s1, 256, %s36, [#allocation6]
    $region9: #{tpu_custom_call.1} parent=1 // pred_fallthru
      _
    // Predicated region
    $region10: #{tpu_custom_call.1} parent=1 // pred_check
      _
    $region11: #{tpu_custom_call.1} parent=1 // pred_check_branch
      %40 = sbr.rel (0) target = $region13
    $region12: #{tpu_custom_call.1} parent=1 // pred_region
      %s42 = ssub.s32 256, 256
      %43 = vsyncadd [#allocation6], %s42
      %s45 = sshll.u32 [#allocation7], 4
      %s46 = int_to_ptr.vmem [resolvable:$true] %s45
      %48 = dma.hbm_to_vmem [thread:$0]  %s2, 256, %s46, [#allocation6]
    $region13: #{tpu_custom_call.1} parent=1 // pred_fallthru
      _
    // Predicated region
    $region14: #{tpu_custom_call.1} parent=1 // pred_check
      _
    $region15: #{tpu_custom_call.1} parent=1 // pred_check_branch
      %50 = sbr.rel (0) target = $region17
    $region16: #{tpu_custom_call.1} parent=1 // pred_region
      %s52 = ssub.s32 256, 256
      %53 = vsyncadd [#allocation9], %s52
      %s55 = sshll.u32 [#allocation8], 4
      %s56 = int_to_ptr.vmem [resolvable:$true] %s55
      %58 = dma.hbm_to_vmem [thread:$0]  %s3, 256, %s56, [#allocation9]
    $region17: #{tpu_custom_call.1} parent=1 // pred_fallthru
      _
    // Predicated region
    $region18: #{tpu_custom_call.1} parent=1 // pred_check
      _
    $region19: #{tpu_custom_call.1} parent=1 // pred_check_branch
      %60 = sbr.rel (0) target = $region21
    $region20: #{tpu_custom_call.1} parent=1 // pred_region
      %61 = dma.done [#allocation3], 256
    $region21: #{tpu_custom_call.1} parent=1 // pred_fallthru
      _
    // Predicated region
    $region22: #{tpu_custom_call.1} parent=1 // pred_check
      _
    $region23: #{tpu_custom_call.1} parent=1 // pred_check_branch
      %63 = sbr.rel (0) target = $region25
    $region24: #{tpu_custom_call.1} parent=1 // pred_region
      %64 = dma.done [#allocation6], 256
    $region25: #{tpu_custom_call.1} parent=1 // pred_fallthru
      _
    // Predicated region
    $region26: #{tpu_custom_call.1} parent=1 // pred_check
      _
    $region27: #{tpu_custom_call.1} parent=1 // pred_check_branch
      %66 = sbr.rel (0) target = $region29
    $region28: #{tpu_custom_call.1} parent=1 // pred_region
      %67 = dma.done [#allocation6], 256
    $region29: #{tpu_custom_call.1} parent=1 // pred_fallthru
      _
    // Predicated region
    $region30: #{tpu_custom_call.1} parent=1 // pred_check
      _
    $region31: #{tpu_custom_call.1} parent=1 // pred_check_branch
      %69 = sbr.rel (0) target = $region33
    $region32: #{tpu_custom_call.1} parent=1 // pred_region
      %70 = dma.done [#allocation9], 256
    $region33: #{tpu_custom_call.1} parent=1 // pred_fallthru
      _
    %v71 = vlaneseq
    %v72 = vand.u32 %v71, 127
    %v73 = vadd.s32 %v72, 128
    %74 = vrot.lane.b32.xlu0 %v72, 1
    %v75 = vpop.permute.xlu0 %74
    %76 = vrot.lane.b32.xlu0 %v73, 1
    %v77 = vpop.permute.xlu0 %76
    %vm78 = vcmp.lt.s32.totalorder %v72, 1
    %v79 = vsel %vm78, %v75, %v77
    %v80 = vsel %vm78, %v77, %v75
    %v81 = vxor.u32 %v72, 1
    %v82 = vxor.u32 %v73, 1
    %vm83 = vcmp.eq.s32.totalorder %v80, %v81
    %vm84 = vcmp.eq.s32.totalorder %v79, %v82
    %85 = vrot.lane.b32.xlu0 %v72, 2
    %v86 = vpop.permute.xlu0 %85
    %87 = vrot.lane.b32.xlu0 %v73, 2
    %v88 = vpop.permute.xlu0 %87
    %vm89 = vcmp.lt.s32.totalorder %v72, 2
    %v90 = vsel %vm89, %v86, %v88
    %v91 = vsel %vm89, %v88, %v86
    %v92 = vxor.u32 %v72, 2
    %v93 = vxor.u32 %v73, 2
    %vm94 = vcmp.eq.s32.totalorder %v91, %v92
    %vm95 = vcmp.eq.s32.totalorder %v90, %v93
    %96 = vrot.lane.b32.xlu0 %v72, 4
    %v97 = vpop.permute.xlu0 %96
    %98 = vrot.lane.b32.xlu0 %v73, 4
    %v99 = vpop.permute.xlu0 %98
    %vm100 = vcmp.lt.s32.totalorder %v72, 4
    %v101 = vsel %vm100, %v97, %v99
    %v102 = vsel %vm100, %v99, %v97
    %v103 = vxor.u32 %v72, 4
    %v104 = vxor.u32 %v73, 4
    %vm105 = vcmp.eq.s32.totalorder %v102, %v103
    %vm106 = vcmp.eq.s32.totalorder %v101, %v104
    %107 = vrot.lane.b32.xlu0 %v72, 8
    %v108 = vpop.permute.xlu0 %107
    %109 = vrot.lane.b32.xlu0 %v73, 8
    %v110 = vpop.permute.xlu0 %109
    %vm111 = vcmp.lt.s32.totalorder %v72, 8
    %v112 = vsel %vm111, %v108, %v110
    %v113 = vsel %vm111, %v110, %v108
    %v114 = vxor.u32 %v72, 8
    %v115 = vxor.u32 %v73, 8
    %vm116 = vcmp.eq.s32.totalorder %v113, %v114
    %vm117 = vcmp.eq.s32.totalorder %v112, %v115
    %118 = vrot.lane.b32.xlu0 %v72, 16
    %v119 = vpop.permute.xlu0 %118
    %120 = vrot.lane.b32.xlu0 %v73, 16
    %v121 = vpop.permute.xlu0 %120
    %vm122 = vcmp.lt.s32.totalorder %v72, 16
    %v123 = vsel %vm122, %v119, %v121
    %v124 = vsel %vm122, %v121, %v119
    %v125 = vxor.u32 %v72, 16
    %v126 = vxor.u32 %v73, 16
    %vm127 = vcmp.eq.s32.totalorder %v124, %v125
    %vm128 = vcmp.eq.s32.totalorder %v123, %v126
    %129 = vrot.lane.b32.xlu0 %v72, 32
    %v130 = vpop.permute.xlu0 %129
    %131 = vrot.lane.b32.xlu0 %v73, 32
    %v132 = vpop.permute.xlu0 %131
    %vm133 = vcmp.lt.s32.totalorder %v72, 32
    %v134 = vsel %vm133, %v130, %v132
    %v135 = vsel %vm133, %v132, %v130
    %v136 = vxor.u32 %v72, 32
    %v137 = vxor.u32 %v73, 32
    %vm138 = vcmp.eq.s32.totalorder %v135, %v136
    %vm139 = vcmp.eq.s32.totalorder %v134, %v137
    %140 = vrot.lane.b32.xlu0 %v72, 64
    %v141 = vpop.permute.xlu0 %140
    %142 = vrot.lane.b32.xlu0 %v73, 64
    %v143 = vpop.permute.xlu0 %142
    %vm144 = vcmp.lt.s32.totalorder %v72, 64
    %v145 = vsel %vm144, %v141, %v143
    %v146 = vsel %vm144, %v143, %v141
    %v147 = vxor.u32 %v72, 64
    %v148 = vxor.u32 %v73, 64
    %vm149 = vcmp.eq.s32.totalorder %v146, %v147
    %vm150 = vcmp.eq.s32.totalorder %v145, %v148
    %v151 = vld [vmem:[#allocation2] sm:$0xff]
    %v152 = vld [vmem:[#allocation2 + $0x8] sm:$0xff]
    %153 = vrot.lane.b32.xlu0 %v151, 1
    %v154 = vpop.permute.xlu0 %153
    %155 = vrot.lane.b32.xlu0 %v152, 1
    %v156 = vpop.permute.xlu0 %155
    %v157 = vsel %vm78, %v154, %v156
    %v158 = vsel %vm78, %v156, %v154
    %159 = vrot.lane.b32.xlu0 %v151, 127
    %v160 = vpop.permute.xlu0 %159
    %161 = vrot.lane.b32.xlu0 %v152, 127
    %v162 = vpop.permute.xlu0 %161
    %vm163 = vcmp.lt.s32.totalorder %v72, 127
    %v164 = vsel %vm163, %v160, %v162
    %v165 = vsel %vm163, %v162, %v160
    %v166 = vsel %vm83, %v158, %v164
    %v167 = vsel %vm84, %v157, %v165
    %168 = vrot.lane.b32.xlu0 %v166, 2
    %v169 = vpop.permute.xlu0 %168
    %170 = vrot.lane.b32.xlu0 %v167, 2
    %v171 = vpop.permute.xlu0 %170
    %v172 = vsel %vm89, %v169, %v171
    %v173 = vsel %vm89, %v171, %v169
    %174 = vrot.lane.b32.xlu0 %v166, 126
    %v175 = vpop.permute.xlu0 %174
    %176 = vrot.lane.b32.xlu0 %v167, 126
    %v177 = vpop.permute.xlu0 %176
    %vm178 = vcmp.lt.s32.totalorder %v72, 126
    %v179 = vsel %vm178, %v175, %v177
    %v180 = vsel %vm178, %v177, %v175
    %v181 = vsel %vm94, %v173, %v179
    %v182 = vsel %vm95, %v172, %v180
    %183 = vrot.lane.b32.xlu0 %v181, 4
    %v184 = vpop.permute.xlu0 %183
    %185 = vrot.lane.b32.xlu0 %v182, 4
    %v186 = vpop.permute.xlu0 %185
    %v187 = vsel %vm100, %v184, %v186
    %v188 = vsel %vm100, %v186, %v184
    %189 = vrot.lane.b32.xlu0 %v181, 124
    %v190 = vpop.permute.xlu0 %189
    %191 = vrot.lane.b32.xlu0 %v182, 124
    %v192 = vpop.permute.xlu0 %191
    %vm193 = vcmp.lt.s32.totalorder %v72, 124
    %v194 = vsel %vm193, %v190, %v192
    %v195 = vsel %vm193, %v192, %v190
    %v196 = vsel %vm105, %v188, %v194
    %v197 = vsel %vm106, %v187, %v195
    %198 = vrot.lane.b32.xlu0 %v196, 8
    %v199 = vpop.permute.xlu0 %198
    %200 = vrot.lane.b32.xlu0 %v197, 8
    %v201 = vpop.permute.xlu0 %200
    %v202 = vsel %vm111, %v199, %v201
    %v203 = vsel %vm111, %v201, %v199
    %204 = vrot.lane.b32.xlu0 %v196, 120
    %v205 = vpop.permute.xlu0 %204
    %206 = vrot.lane.b32.xlu0 %v197, 120
    %v207 = vpop.permute.xlu0 %206
    %vm208 = vcmp.lt.s32.totalorder %v72, 120
    %v209 = vsel %vm208, %v205, %v207
    %v210 = vsel %vm208, %v207, %v205
    %v211 = vsel %vm116, %v203, %v209
    %v212 = vsel %vm117, %v202, %v210
    %213 = vrot.lane.b32.xlu0 %v211, 16
    %v214 = vpop.permute.xlu0 %213
    %215 = vrot.lane.b32.xlu0 %v212, 16
    %v216 = vpop.permute.xlu0 %215
    %v217 = vsel %vm122, %v214, %v216
    %v218 = vsel %vm122, %v216, %v214
    %219 = vrot.lane.b32.xlu0 %v211, 112
    %v220 = vpop.permute.xlu0 %219
    %221 = vrot.lane.b32.xlu0 %v212, 112
    %v222 = vpop.permute.xlu0 %221
    %vm223 = vcmp.lt.s32.totalorder %v72, 112
    %v224 = vsel %vm223, %v220, %v222
    %v225 = vsel %vm223, %v222, %v220
    %v226 = vsel %vm127, %v218, %v224
    %v227 = vsel %vm128, %v217, %v225
    %228 = vrot.lane.b32.xlu0 %v226, 32
    %v229 = vpop.permute.xlu0 %228
    %230 = vrot.lane.b32.xlu0 %v227, 32
    %v231 = vpop.permute.xlu0 %230
    %v232 = vsel %vm133, %v229, %v231
    %v233 = vsel %vm133, %v231, %v229
    %234 = vrot.lane.b32.xlu0 %v226, 96
    %v235 = vpop.permute.xlu0 %234
    %236 = vrot.lane.b32.xlu0 %v227, 96
    %v237 = vpop.permute.xlu0 %236
    %vm238 = vcmp.lt.s32.totalorder %v72, 96
    %v239 = vsel %vm238, %v235, %v237
    %v240 = vsel %vm238, %v237, %v235
    %v241 = vsel %vm138, %v233, %v239
    %v242 = vsel %vm139, %v232, %v240
    %243 = vrot.lane.b32.xlu0 %v241, 64
    %v244 = vpop.permute.xlu0 %243
    %245 = vrot.lane.b32.xlu0 %v242, 64
    %v246 = vpop.permute.xlu0 %245
    %v247 = vsel %vm144, %v244, %v246
    %v248 = vsel %vm144, %v246, %v244
    %v249 = vsel %vm149, %v248, %v247
    %v250 = vsel %vm150, %v247, %v248
    %251 = vst [vmem:[#allocation10] sm:$0xff] %v250
    %252 = vst [vmem:[#allocation10 + $0x8] sm:$0xff] %v249
    %v253 = vld [vmem:[#allocation5] sm:$0xff]
    %v254 = vld [vmem:[#allocation5 + $0x8] sm:$0xff]
    %255 = vrot.lane.b32.xlu0 %v253, 1
    %v256 = vpop.permute.xlu0 %255
    %257 = vrot.lane.b32.xlu0 %v254, 1
    %v258 = vpop.permute.xlu0 %257
    %v259 = vsel %vm78, %v256, %v258
    %v260 = vsel %vm78, %v258, %v256
    %261 = vrot.lane.b32.xlu0 %v253, 127
    %v262 = vpop.permute.xlu0 %261
    %263 = vrot.lane.b32.xlu0 %v254, 127
    %v264 = vpop.permute.xlu0 %263
    %v265 = vsel %vm163, %v262, %v264
    %v266 = vsel %vm163, %v264, %v262
    %v267 = vsel %vm83, %v260, %v265
    %v268 = vsel %vm84, %v259, %v266
    %269 = vrot.lane.b32.xlu0 %v267, 2
    %v270 = vpop.permute.xlu0 %269
    %271 = vrot.lane.b32.xlu0 %v268, 2
    %v272 = vpop.permute.xlu0 %271
    %v273 = vsel %vm89, %v270, %v272
    %v274 = vsel %vm89, %v272, %v270
    %275 = vrot.lane.b32.xlu0 %v267, 126
    %v276 = vpop.permute.xlu0 %275
    %277 = vrot.lane.b32.xlu0 %v268, 126
    %v278 = vpop.permute.xlu0 %277
    %v279 = vsel %vm178, %v276, %v278
    %v280 = vsel %vm178, %v278, %v276
    %v281 = vsel %vm94, %v274, %v279
    %v282 = vsel %vm95, %v273, %v280
    %283 = vrot.lane.b32.xlu0 %v281, 4
    %v284 = vpop.permute.xlu0 %283
    %285 = vrot.lane.b32.xlu0 %v282, 4
    %v286 = vpop.permute.xlu0 %285
    %v287 = vsel %vm100, %v284, %v286
    %v288 = vsel %vm100, %v286, %v284
    %289 = vrot.lane.b32.xlu0 %v281, 124
    %v290 = vpop.permute.xlu0 %289
    %291 = vrot.lane.b32.xlu0 %v282, 124
    %v292 = vpop.permute.xlu0 %291
    %v293 = vsel %vm193, %v290, %v292
    %v294 = vsel %vm193, %v292, %v290
    %v295 = vsel %vm105, %v288, %v293
    %v296 = vsel %vm106, %v287, %v294
    %297 = vrot.lane.b32.xlu0 %v295, 8
    %v298 = vpop.permute.xlu0 %297
    %299 = vrot.lane.b32.xlu0 %v296, 8
    %v300 = vpop.permute.xlu0 %299
    %v301 = vsel %vm111, %v298, %v300
    %v302 = vsel %vm111, %v300, %v298
    %303 = vrot.lane.b32.xlu0 %v295, 120
    %v304 = vpop.permute.xlu0 %303
    %305 = vrot.lane.b32.xlu0 %v296, 120
    %v306 = vpop.permute.xlu0 %305
    %v307 = vsel %vm208, %v304, %v306
    %v308 = vsel %vm208, %v306, %v304
    %v309 = vsel %vm116, %v302, %v307
    %v310 = vsel %vm117, %v301, %v308
    %311 = vrot.lane.b32.xlu0 %v309, 16
    %v312 = vpop.permute.xlu0 %311
    %313 = vrot.lane.b32.xlu0 %v310, 16
    %v314 = vpop.permute.xlu0 %313
    %v315 = vsel %vm122, %v312, %v314
    %v316 = vsel %vm122, %v314, %v312
    %317 = vrot.lane.b32.xlu0 %v309, 112
    %v318 = vpop.permute.xlu0 %317
    %319 = vrot.lane.b32.xlu0 %v310, 112
    %v320 = vpop.permute.xlu0 %319
    %v321 = vsel %vm223, %v318, %v320
    %v322 = vsel %vm223, %v320, %v318
    %v323 = vsel %vm127, %v316, %v321
    %v324 = vsel %vm128, %v315, %v322
    %325 = vrot.lane.b32.xlu0 %v323, 32
    %v326 = vpop.permute.xlu0 %325
    %327 = vrot.lane.b32.xlu0 %v324, 32
    %v328 = vpop.permute.xlu0 %327
    %v329 = vsel %vm133, %v326, %v328
    %v330 = vsel %vm133, %v328, %v326
    %331 = vrot.lane.b32.xlu0 %v323, 96
    %v332 = vpop.permute.xlu0 %331
    %333 = vrot.lane.b32.xlu0 %v324, 96
    %v334 = vpop.permute.xlu0 %333
    %v335 = vsel %vm238, %v332, %v334
    %v336 = vsel %vm238, %v334, %v332
    %v337 = vsel %vm138, %v330, %v335
    %v338 = vsel %vm139, %v329, %v336
    %339 = vrot.lane.b32.xlu0 %v337, 64
    %v340 = vpop.permute.xlu0 %339
    %341 = vrot.lane.b32.xlu0 %v338, 64
    %v342 = vpop.permute.xlu0 %341
    %v343 = vsel %vm144, %v340, %v342
    %v344 = vsel %vm144, %v342, %v340
    %v345 = vsel %vm149, %v344, %v343
    %v346 = vsel %vm150, %v343, %v344
    %347 = vst [vmem:[#allocation11] sm:$0xff] %v346
    %348 = vst [vmem:[#allocation11 + $0x8] sm:$0xff] %v345
    %v349 = vld [vmem:[#allocation7] sm:$0xff]
    %v350 = vld [vmem:[#allocation7 + $0x8] sm:$0xff]
    %351 = vrot.lane.b32.xlu0 %v349, 1
    %v352 = vpop.permute.xlu0 %351
    %353 = vrot.lane.b32.xlu0 %v350, 1
    %v354 = vpop.permute.xlu0 %353
    %v355 = vsel %vm78, %v352, %v354
    %v356 = vsel %vm78, %v354, %v352
    %357 = vrot.lane.b32.xlu0 %v349, 127
    %v358 = vpop.permute.xlu0 %357
    %359 = vrot.lane.b32.xlu0 %v350, 127
    %v360 = vpop.permute.xlu0 %359
    %v361 = vsel %vm163, %v358, %v360
    %v362 = vsel %vm163, %v360, %v358
    %v363 = vsel %vm83, %v356, %v361
    %v364 = vsel %vm84, %v355, %v362
    %365 = vrot.lane.b32.xlu0 %v363, 2
    %v366 = vpop.permute.xlu0 %365
    %367 = vrot.lane.b32.xlu0 %v364, 2
    %v368 = vpop.permute.xlu0 %367
    %v369 = vsel %vm89, %v366, %v368
    %v370 = vsel %vm89, %v368, %v366
    %371 = vrot.lane.b32.xlu0 %v363, 126
    %v372 = vpop.permute.xlu0 %371
    %373 = vrot.lane.b32.xlu0 %v364, 126
    %v374 = vpop.permute.xlu0 %373
    %v375 = vsel %vm178, %v372, %v374
    %v376 = vsel %vm178, %v374, %v372
    %v377 = vsel %vm94, %v370, %v375
    %v378 = vsel %vm95, %v369, %v376
    %379 = vrot.lane.b32.xlu0 %v377, 4
    %v380 = vpop.permute.xlu0 %379
    %381 = vrot.lane.b32.xlu0 %v378, 4
    %v382 = vpop.permute.xlu0 %381
    %v383 = vsel %vm100, %v380, %v382
    %v384 = vsel %vm100, %v382, %v380
    %385 = vrot.lane.b32.xlu0 %v377, 124
    %v386 = vpop.permute.xlu0 %385
    %387 = vrot.lane.b32.xlu0 %v378, 124
    %v388 = vpop.permute.xlu0 %387
    %v389 = vsel %vm193, %v386, %v388
    %v390 = vsel %vm193, %v388, %v386
    %v391 = vsel %vm105, %v384, %v389
    %v392 = vsel %vm106, %v383, %v390
    %393 = vrot.lane.b32.xlu0 %v391, 8
    %v394 = vpop.permute.xlu0 %393
    %395 = vrot.lane.b32.xlu0 %v392, 8
    %v396 = vpop.permute.xlu0 %395
    %v397 = vsel %vm111, %v394, %v396
    %v398 = vsel %vm111, %v396, %v394
    %399 = vrot.lane.b32.xlu0 %v391, 120
    %v400 = vpop.permute.xlu0 %399
    %401 = vrot.lane.b32.xlu0 %v392, 120
    %v402 = vpop.permute.xlu0 %401
    %v403 = vsel %vm208, %v400, %v402
    %v404 = vsel %vm208, %v402, %v400
    %v405 = vsel %vm116, %v398, %v403
    %v406 = vsel %vm117, %v397, %v404
    %407 = vrot.lane.b32.xlu0 %v405, 16
    %v408 = vpop.permute.xlu0 %407
    %409 = vrot.lane.b32.xlu0 %v406, 16
    %v410 = vpop.permute.xlu0 %409
    %v411 = vsel %vm122, %v408, %v410
    %v412 = vsel %vm122, %v410, %v408
    %413 = vrot.lane.b32.xlu0 %v405, 112
    %v414 = vpop.permute.xlu0 %413
    %415 = vrot.lane.b32.xlu0 %v406, 112
    %v416 = vpop.permute.xlu0 %415
    %v417 = vsel %vm223, %v414, %v416
    %v418 = vsel %vm223, %v416, %v414
    %v419 = vsel %vm127, %v412, %v417
    %v420 = vsel %vm128, %v411, %v418
    %421 = vrot.lane.b32.xlu0 %v419, 32
    %v422 = vpop.permute.xlu0 %421
    %423 = vrot.lane.b32.xlu0 %v420, 32
    %v424 = vpop.permute.xlu0 %423
    %v425 = vsel %vm133, %v422, %v424
    %v426 = vsel %vm133, %v424, %v422
    %427 = vrot.lane.b32.xlu0 %v419, 96
    %v428 = vpop.permute.xlu0 %427
    %429 = vrot.lane.b32.xlu0 %v420, 96
    %v430 = vpop.permute.xlu0 %429
    %v431 = vsel %vm238, %v428, %v430
    %v432 = vsel %vm238, %v430, %v428
    %v433 = vsel %vm138, %v426, %v431
    %v434 = vsel %vm139, %v425, %v432
    %435 = vrot.lane.b32.xlu0 %v433, 64
    %v436 = vpop.permute.xlu0 %435
    %437 = vrot.lane.b32.xlu0 %v434, 64
    %v438 = vpop.permute.xlu0 %437
    %v439 = vsel %vm144, %v436, %v438
    %v440 = vsel %vm144, %v438, %v436
    %v441 = vsel %vm149, %v440, %v439
    %v442 = vsel %vm150, %v439, %v440
    %443 = vst [vmem:[#allocation13] sm:$0xff] %v442
    %444 = vst [vmem:[#allocation13 + $0x8] sm:$0xff] %v441
    %v445 = vld [vmem:[#allocation8] sm:$0xff]
    %v446 = vld [vmem:[#allocation8 + $0x8] sm:$0xff]
    %447 = vrot.lane.b32.xlu0 %v445, 1
    %v448 = vpop.permute.xlu0 %447
    %449 = vrot.lane.b32.xlu0 %v446, 1
    %v450 = vpop.permute.xlu0 %449
    %v451 = vsel %vm78, %v448, %v450
    %v452 = vsel %vm78, %v450, %v448
    %453 = vrot.lane.b32.xlu0 %v445, 127
    %v454 = vpop.permute.xlu0 %453
    %455 = vrot.lane.b32.xlu0 %v446, 127
    %v456 = vpop.permute.xlu0 %455
    %v457 = vsel %vm163, %v454, %v456
    %v458 = vsel %vm163, %v456, %v454
    %v459 = vsel %vm83, %v452, %v457
    %v460 = vsel %vm84, %v451, %v458
    %461 = vrot.lane.b32.xlu0 %v459, 2
    %v462 = vpop.permute.xlu0 %461
    %463 = vrot.lane.b32.xlu0 %v460, 2
    %v464 = vpop.permute.xlu0 %463
    %v465 = vsel %vm89, %v462, %v464
    %v466 = vsel %vm89, %v464, %v462
    %467 = vrot.lane.b32.xlu0 %v459, 126
    %v468 = vpop.permute.xlu0 %467
    %469 = vrot.lane.b32.xlu0 %v460, 126
    %v470 = vpop.permute.xlu0 %469
    %v471 = vsel %vm178, %v468, %v470
    %v472 = vsel %vm178, %v470, %v468
    %v473 = vsel %vm94, %v466, %v471
    %v474 = vsel %vm95, %v465, %v472
    %475 = vrot.lane.b32.xlu0 %v473, 4
    %v476 = vpop.permute.xlu0 %475
    %477 = vrot.lane.b32.xlu0 %v474, 4
    %v478 = vpop.permute.xlu0 %477
    %v479 = vsel %vm100, %v476, %v478
    %v480 = vsel %vm100, %v478, %v476
    %481 = vrot.lane.b32.xlu0 %v473, 124
    %v482 = vpop.permute.xlu0 %481
    %483 = vrot.lane.b32.xlu0 %v474, 124
    %v484 = vpop.permute.xlu0 %483
    %v485 = vsel %vm193, %v482, %v484
    %v486 = vsel %vm193, %v484, %v482
    %v487 = vsel %vm105, %v480, %v485
    %v488 = vsel %vm106, %v479, %v486
    %489 = vrot.lane.b32.xlu0 %v487, 8
    %v490 = vpop.permute.xlu0 %489
    %491 = vrot.lane.b32.xlu0 %v488, 8
    %v492 = vpop.permute.xlu0 %491
    %v493 = vsel %vm111, %v490, %v492
    %v494 = vsel %vm111, %v492, %v490
    %495 = vrot.lane.b32.xlu0 %v487, 120
    %v496 = vpop.permute.xlu0 %495
    %497 = vrot.lane.b32.xlu0 %v488, 120
    %v498 = vpop.permute.xlu0 %497
    %v499 = vsel %vm208, %v496, %v498
    %v500 = vsel %vm208, %v498, %v496
    %v501 = vsel %vm116, %v494, %v499
    %v502 = vsel %vm117, %v493, %v500
    %503 = vrot.lane.b32.xlu0 %v501, 16
    %v504 = vpop.permute.xlu0 %503
    %505 = vrot.lane.b32.xlu0 %v502, 16
    %v506 = vpop.permute.xlu0 %505
    %v507 = vsel %vm122, %v504, %v506
    %v508 = vsel %vm122, %v506, %v504
    %509 = vrot.lane.b32.xlu0 %v501, 112
    %v510 = vpop.permute.xlu0 %509
    %511 = vrot.lane.b32.xlu0 %v502, 112
    %v512 = vpop.permute.xlu0 %511
    %v513 = vsel %vm223, %v510, %v512
    %v514 = vsel %vm223, %v512, %v510
    %v515 = vsel %vm127, %v508, %v513
    %v516 = vsel %vm128, %v507, %v514
    %517 = vrot.lane.b32.xlu0 %v515, 32
    %v518 = vpop.permute.xlu0 %517
    %519 = vrot.lane.b32.xlu0 %v516, 32
    %v520 = vpop.permute.xlu0 %519
    %v521 = vsel %vm133, %v518, %v520
    %v522 = vsel %vm133, %v520, %v518
    %523 = vrot.lane.b32.xlu0 %v515, 96
    %v524 = vpop.permute.xlu0 %523
    %525 = vrot.lane.b32.xlu0 %v516, 96
    %v526 = vpop.permute.xlu0 %525
    %v527 = vsel %vm238, %v524, %v526
    %v528 = vsel %vm238, %v526, %v524
    %v529 = vsel %vm138, %v522, %v527
    %v530 = vsel %vm139, %v521, %v528
    %531 = vrot.lane.b32.xlu0 %v529, 64
    %v532 = vpop.permute.xlu0 %531
    %533 = vrot.lane.b32.xlu0 %v530, 64
    %v534 = vpop.permute.xlu0 %533
    %v535 = vsel %vm144, %v532, %v534
    %v536 = vsel %vm144, %v534, %v532
    %v537 = vsel %vm149, %v536, %v535
    %v538 = vsel %vm150, %v535, %v536
    %539 = vst [vmem:[#allocation14] sm:$0xff] %v538
    %540 = vst [vmem:[#allocation14 + $0x8] sm:$0xff] %v537
    // Predicated region
    $region34: #{tpu_custom_call.1} parent=1 // pred_check
      _
    $region35: #{tpu_custom_call.1} parent=1 // pred_check_branch
      %542 = sbr.rel (0) target = $region37
    $region36: #{tpu_custom_call.1} parent=1 // pred_region
      %s544 = ssub.s32 256, 256
      %545 = vsyncadd [#allocation4], %s544
      %s547 = sshll.u32 [#allocation10], 4
      %s548 = int_to_ptr.vmem [resolvable:$true] %s547
      %550 = dma.vmem_to_hbm [thread:$0]  %s548, 256, %s4, [#allocation4]
    $region37: #{tpu_custom_call.1} parent=1 // pred_fallthru
      _
    // Predicated region
    $region38: #{tpu_custom_call.1} parent=1 // pred_check
      _
    $region39: #{tpu_custom_call.1} parent=1 // pred_check_branch
      %552 = sbr.rel (0) target = $region41
    $region40: #{tpu_custom_call.1} parent=1 // pred_region
      %s554 = ssub.s32 256, 256
      %555 = vsyncadd [#allocation12], %s554
      %s557 = sshll.u32 [#allocation11], 4
      %s558 = int_to_ptr.vmem [resolvable:$true] %s557
      %560 = dma.vmem_to_hbm [thread:$0]  %s558, 256, %s5, [#allocation12]
    $region41: #{tpu_custom_call.1} parent=1 // pred_fallthru
      _
    // Predicated region
    $region42: #{tpu_custom_call.1} parent=1 // pred_check
      _
    $region43: #{tpu_custom_call.1} parent=1 // pred_check_branch
      %562 = sbr.rel (0) target = $region45
    $region44: #{tpu_custom_call.1} parent=1 // pred_region
      %s564 = ssub.s32 256, 256
      %565 = vsyncadd [#allocation12], %s564
      %s567 = sshll.u32 [#allocation13], 4
      %s568 = int_to_ptr.vmem [resolvable:$true] %s567
      %570 = dma.vmem_to_hbm [thread:$0]  %s568, 256, %s6, [#allocation12]
    $region45: #{tpu_custom_call.1} parent=1 // pred_fallthru
      _
    // Predicated region
    $region46: #{tpu_custom_call.1} parent=1 // pred_check
      _
    $region47: #{tpu_custom_call.1} parent=1 // pred_check_branch
      %572 = sbr.rel (0) target = $region49
    $region48: #{tpu_custom_call.1} parent=1 // pred_region
      %s574 = ssub.s32 256, 256
      %575 = vsyncadd [#allocation15], %s574
      %s577 = sshll.u32 [#allocation14], 4
      %s578 = int_to_ptr.vmem [resolvable:$true] %s577
      %580 = dma.vmem_to_hbm [thread:$0]  %s578, 256, %s7, [#allocation15]
    $region49: #{tpu_custom_call.1} parent=1 // pred_fallthru
      _
    // Predicated region
    $region50: #{tpu_custom_call.1} parent=1 // pred_check
      _
    $region51: #{tpu_custom_call.1} parent=1 // pred_check_branch
      %582 = sbr.rel (0) target = $region53
    $region52: #{tpu_custom_call.1} parent=1 // pred_region
      %583 = dma.done [#allocation4], 256
    $region53: #{tpu_custom_call.1} parent=1 // pred_fallthru
      _
    // Predicated region
    $region54: #{tpu_custom_call.1} parent=1 // pred_check
      _
    $region55: #{tpu_custom_call.1} parent=1 // pred_check_branch
      %585 = sbr.rel (0) target = $region57
    $region56: #{tpu_custom_call.1} parent=1 // pred_region
      %586 = dma.done [#allocation12], 256
    $region57: #{tpu_custom_call.1} parent=1 // pred_fallthru
      _
    // Predicated region
    $region58: #{tpu_custom_call.1} parent=1 // pred_check
      _
    $region59: #{tpu_custom_call.1} parent=1 // pred_check_branch
      %588 = sbr.rel (0) target = $region61
    $region60: #{tpu_custom_call.1} parent=1 // pred_region
      %589 = dma.done [#allocation12], 256
    $region61: #{tpu_custom_call.1} parent=1 // pred_fallthru
      _
    // Predicated region
    $region62: #{tpu_custom_call.1} parent=1 // pred_check
      _
    $region63: #{tpu_custom_call.1} parent=1 // pred_check_branch
      %591 = sbr.rel (0) target = $region65
    $region64: #{tpu_custom_call.1} parent=1 // pred_region
      %592 = dma.done [#allocation15], 256
    $region65: #{tpu_custom_call.1} parent=1 // pred_fallthru
      _
    %593 = vsyncpa [#allocation3], 1
    %594 = vsyncpa [#allocation6], 1
    %595 = vsyncpa [#allocation9], 1
    %596 = vsyncpa [#allocation4], 1
    %597 = vsyncpa [#allocation12], 1
    %598 = vsyncpa [#allocation15], 1

</llo_original>
